<compile_context>
chip_gen: v7x
topology: tpu7x:2x2x1
jax: 0.10.0
libtpu: 0.0.40
codegen_flags: <defaults>
</compile_context>

<pallas_src>
import functools

import jax
import jax.numpy as jnp
from jax.experimental import pallas as pl
from jax.experimental.pallas import tpu as pltpu

EPS = 1e-7
_LANE = 128


def _choose_tile(c, m):
    """Lane-tile width (multiple of 128) sized to fit VMEM on v5e/v6e/v7x."""
    m_padded = pl.cdiv(m, _LANE) * _LANE
    c_pad = max(8, pl.cdiv(c, 8) * 8)          # sublane padding for small C
    bytes_per_lane_col = c_pad * 4             # f32
    budget = 16 * 1024 * 1024                  # 2 inputs x 2 bufs + 3 accs
    max_tile = budget // (7 * bytes_per_lane_col)
    tile = (min(max_tile, m_padded) // _LANE) * _LANE
    return max(_LANE, tile)


def _dice_partial_kernel(p_ref, t_ref, out_ref, acc_pt, acc_pp, acc_tt,
                         *, tile, total_m, need_mask):
    # p_ref/t_ref: (1, C, TILE) VMEM blocks; out_ref: (1, C, 3) per-batch sums.
    j = pl.program_id(1)

    @pl.when(j == 0)
    def _():
        acc_pt[...] = jnp.zeros_like(acc_pt)
        acc_pp[...] = jnp.zeros_like(acc_pp)
        acc_tt[...] = jnp.zeros_like(acc_tt)

    # transform: sigmoid on prediction (EUP), identity on target.
    p = jax.nn.sigmoid(p_ref[0].astype(jnp.float32))   # (C, TILE)
    t = t_ref[0].astype(jnp.float32)                   # (C, TILE)

    if need_mask:  # only compiled in when H*W is not a multiple of TILE
        lane = jax.lax.broadcasted_iota(jnp.int32, p.shape, 1)
        valid = (j * tile + lane) < total_m
        p = jnp.where(valid, p, 0.0)
        t = jnp.where(valid, t, 0.0)

    # Lane-resident partial sums: pure VPU in the steady state (no XLU).
    acc_pt[...] += p * t
    acc_pp[...] += p * p
    acc_tt[...] += t * t

    @pl.when(j == pl.num_programs(1) - 1)
    def _():
        pt = jnp.sum(acc_pt[...], axis=-1, keepdims=True)   # (C, 1)
        pp = jnp.sum(acc_pp[...], axis=-1, keepdims=True)
        tt = jnp.sum(acc_tt[...], axis=-1, keepdims=True)
        col = jax.lax.broadcasted_iota(jnp.int32, (pt.shape[0], 3), 1)
        out_ref[0] = jnp.where(col == 0, pt, jnp.where(col == 1, pp, tt))


def loss_wrapper_forward(prediction, target):
    """prediction, target: (N, C, H, W) float arrays. Returns scalar loss."""
    n, c, h, w = prediction.shape
    assert target.shape == prediction.shape
    m = h * w

    # Free, contiguity-preserving reshape (no transpose / extra HBM pass).
    pred = prediction.reshape(n, c, m)
    targ = target.reshape(n, c, m)

    tile = _choose_tile(c, m)
    grid_m = pl.cdiv(m, tile)
    need_mask = (m % tile) != 0

    kernel = functools.partial(
        _dice_partial_kernel, tile=tile, total_m=m, need_mask=need_mask)

    partials = pl.pallas_call(
        kernel,
        out_shape=jax.ShapeDtypeStruct((n, c, 3), jnp.float32),
        grid_spec=pltpu.PrefetchScalarGridSpec(
            num_scalar_prefetch=0,
            grid=(n, grid_m),
            in_specs=[
                pl.BlockSpec((1, c, tile), lambda i, j: (i, 0, j)),
                pl.BlockSpec((1, c, tile), lambda i, j: (i, 0, j)),
            ],
            out_specs=pl.BlockSpec((1, c, 3), lambda i, j: (i, 0, 0)),
            scratch_shapes=[pltpu.VMEM((c, tile), jnp.float32)] * 3,
        ),
        compiler_params=pltpu.CompilerParams(
            dimension_semantics=("parallel", "arbitrary"),
            vmem_limit_bytes=32 * 1024 * 1024,
        ),
    )(pred, targ)

    # Trivial O(N*C) epilogue: combine per-batch partial sums -> Dice loss.
    sums = jnp.sum(partials, axis=0)                 # (C, 3)
    numerator = sums[:, 0]
    denominator = sums[:, 1] + sums[:, 2]
    score = 2.0 * numerator / jnp.maximum(denominator, EPS)
    return jnp.sum(1.0 - score)


def _reference(prediction, target):
    n, c, h, w = prediction.shape
    p = jax.nn.sigmoid(prediction.astype(jnp.float32))
    p = jnp.transpose(p, (1, 0, 2, 3)).reshape(c, -1)
    t = jnp.transpose(target.astype(jnp.float32), (1, 0, 2, 3)).reshape(c, -1)
    num = jnp.sum(p * t, axis=-1)
    den = jnp.sum(p * p, axis=-1) + jnp.sum(t * t, axis=-1)
    return jnp.sum(1.0 - 2.0 * num / jnp.maximum(den, EPS))


if __name__ == "__main__":
    key = jax.random.PRNGKey(0)
    k1, k2 = jax.random.split(key)

    N, C, H, W = 2, 4, 16, 16
    prediction = jax.random.normal(k1, (N, C, H, W), dtype=jnp.float32)
    # binary-ish segmentation target
    target = (jax.random.uniform(k2, (N, C, H, W)) > 0.5).astype(jnp.float32)

    loss = jax.jit(loss_wrapper_forward)(prediction, target)
    loss = jax.block_until_ready(loss)

    ref = _reference(prediction, target)
    assert jnp.allclose(loss, ref, rtol=1e-5, atol=1e-5), (loss, ref)

    print("KERNEL_OK")
</pallas_src>

<mosaic_0001>
module attributes {stable_mosaic.version = 11 : i64} {
  func.func @_dice_partial_kernel(%arg0: i32, %arg1: i32, %arg2: memref<1x4x256xf32, #tpu.memory_space<vmem>>, %arg3: memref<1x4x256xf32, #tpu.memory_space<vmem>>, %arg4: memref<1x4x3xf32, #tpu.memory_space<vmem>>, %arg5: memref<4x256xf32, #tpu.memory_space<vmem>>, %arg6: memref<4x256xf32, #tpu.memory_space<vmem>>, %arg7: memref<4x256xf32, #tpu.memory_space<vmem>>) attributes {dimension_semantics = [#tpu.dimension_semantics<parallel>, #tpu.dimension_semantics<arbitrary>], iteration_bounds = array<i64: 2, 1>, scalar_prefetch = 0 : i64, scratch_operands = 3 : i64, tpu.core_type = #tpu.core_type<tc>, window_params = [{transform_indices = @transform_0, window_bounds = array<i64: 1, 4, 256>}, {transform_indices = @transform_1, window_bounds = array<i64: 1, 4, 256>}, {transform_indices = @transform_2, window_bounds = array<i64: 1, 4, 3>}]} {
    %c0_i32 = arith.constant 0 : i32
    %0 = arith.cmpi eq, %arg1, %c0_i32 : i32
    %1 = arith.extui %0 : i1 to i32
    %c0_i32_0 = arith.constant 0 : i32
    %2 = arith.cmpi ne, %1, %c0_i32_0 : i32
    scf.if %2 {
      %cst_20 = arith.constant 0.000000e+00 : f32
      %27 = vector.broadcast %cst_20 : f32 to vector<4x256xf32>
      %c0_21 = arith.constant 0 : index
      %c0_22 = arith.constant 0 : index
      %28 = vector.load %arg5[%c0_21, %c0_22] : memref<4x256xf32, #tpu.memory_space<vmem>>, vector<4x256xf32>
      tpu.vector_store %arg5[%c0_21, %c0_22], %27 {strides = array<i32>} : memref<4x256xf32, #tpu.memory_space<vmem>>, vector<4x256xf32>,
      %cst_23 = arith.constant 0.000000e+00 : f32
      %29 = vector.broadcast %cst_23 : f32 to vector<4x256xf32>
      %c0_24 = arith.constant 0 : index
      %c0_25 = arith.constant 0 : index
      %30 = vector.load %arg6[%c0_24, %c0_25] : memref<4x256xf32, #tpu.memory_space<vmem>>, vector<4x256xf32>
      tpu.vector_store %arg6[%c0_24, %c0_25], %29 {strides = array<i32>} : memref<4x256xf32, #tpu.memory_space<vmem>>, vector<4x256xf32>,
      %cst_26 = arith.constant 0.000000e+00 : f32
      %31 = vector.broadcast %cst_26 : f32 to vector<4x256xf32>
      %c0_27 = arith.constant 0 : index
      %c0_28 = arith.constant 0 : index
      %32 = vector.load %arg7[%c0_27, %c0_28] : memref<4x256xf32, #tpu.memory_space<vmem>>, vector<4x256xf32>
      tpu.vector_store %arg7[%c0_27, %c0_28], %31 {strides = array<i32>} : memref<4x256xf32, #tpu.memory_space<vmem>>, vector<4x256xf32>,
    } else {
    }
    %c0 = arith.constant 0 : index
    %c0_1 = arith.constant 0 : index
    %c0_2 = arith.constant 0 : index
    %3 = vector.load %arg2[%c0, %c0_1, %c0_2] : memref<1x4x256xf32, #tpu.memory_space<vmem>>, vector<1x4x256xf32>
    %4 = vector.shape_cast %3 : vector<1x4x256xf32> to vector<4x256xf32>
    %5 = arith.negf %4 : vector<4x256xf32>
    %6 = math.exp %5 : vector<4x256xf32>
    %cst = arith.constant 1.000000e+00 : f32
    %7 = vector.broadcast %cst : f32 to vector<4x256xf32>
    %8 = arith.addf %7, %6 : vector<4x256xf32>
    %9 = arith.divf %7, %8 : vector<4x256xf32>
    %c0_3 = arith.constant 0 : index
    %c0_4 = arith.constant 0 : index
    %c0_5 = arith.constant 0 : index
    %10 = vector.load %arg3[%c0_3, %c0_4, %c0_5] : memref<1x4x256xf32, #tpu.memory_space<vmem>>, vector<1x4x256xf32>
    %11 = vector.shape_cast %10 : vector<1x4x256xf32> to vector<4x256xf32>
    %c0_6 = arith.constant 0 : index
    %c0_7 = arith.constant 0 : index
    %12 = vector.load %arg5[%c0_6, %c0_7] : memref<4x256xf32, #tpu.memory_space<vmem>>, vector<4x256xf32>
    %13 = arith.mulf %9, %11 : vector<4x256xf32>
    %14 = arith.addf %12, %13 : vector<4x256xf32>
    %c0_8 = arith.constant 0 : index
    %c0_9 = arith.constant 0 : index
    %15 = vector.load %arg5[%c0_8, %c0_9] : memref<4x256xf32, #tpu.memory_space<vmem>>, vector<4x256xf32>
    tpu.vector_store %arg5[%c0_8, %c0_9], %14 {strides = array<i32>} : memref<4x256xf32, #tpu.memory_space<vmem>>, vector<4x256xf32>,
    %c0_10 = arith.constant 0 : index
    %c0_11 = arith.constant 0 : index
    %16 = vector.load %arg6[%c0_10, %c0_11] : memref<4x256xf32, #tpu.memory_space<vmem>>, vector<4x256xf32>
    %17 = arith.mulf %9, %9 : vector<4x256xf32>
    %18 = arith.addf %16, %17 : vector<4x256xf32>
    %c0_12 = arith.constant 0 : index
    %c0_13 = arith.constant 0 : index
    %19 = vector.load %arg6[%c0_12, %c0_13] : memref<4x256xf32, #tpu.memory_space<vmem>>, vector<4x256xf32>
    tpu.vector_store %arg6[%c0_12, %c0_13], %18 {strides = array<i32>} : memref<4x256xf32, #tpu.memory_space<vmem>>, vector<4x256xf32>,
    %c0_14 = arith.constant 0 : index
    %c0_15 = arith.constant 0 : index
    %20 = vector.load %arg7[%c0_14, %c0_15] : memref<4x256xf32, #tpu.memory_space<vmem>>, vector<4x256xf32>
    %21 = arith.mulf %11, %11 : vector<4x256xf32>
    %22 = arith.addf %20, %21 : vector<4x256xf32>
    %c0_16 = arith.constant 0 : index
    %c0_17 = arith.constant 0 : index
    %23 = vector.load %arg7[%c0_16, %c0_17] : memref<4x256xf32, #tpu.memory_space<vmem>>, vector<4x256xf32>
    tpu.vector_store %arg7[%c0_16, %c0_17], %22 {strides = array<i32>} : memref<4x256xf32, #tpu.memory_space<vmem>>, vector<4x256xf32>,
    %c0_i32_18 = arith.constant 0 : i32
    %24 = arith.cmpi eq, %arg1, %c0_i32_18 : i32
    %25 = arith.extui %24 : i1 to i32
    %c0_i32_19 = arith.constant 0 : i32
    %26 = arith.cmpi ne, %25, %c0_i32_19 : i32
    scf.if %26 {
      %c0_20 = arith.constant 0 : index
      %c0_21 = arith.constant 0 : index
      %27 = vector.load %arg5[%c0_20, %c0_21] : memref<4x256xf32, #tpu.memory_space<vmem>>, vector<4x256xf32>
      %cst_22 = arith.constant dense<0.000000e+00> : vector<4xf32>
      %28 = vector.multi_reduction <add>, %27, %cst_22 [1] : vector<4x256xf32> to vector<4xf32>
      %29 = vector.shape_cast %28 : vector<4xf32> to vector<4x1xf32>
      %c0_23 = arith.constant 0 : index
      %c0_24 = arith.constant 0 : index
      %30 = vector.load %arg6[%c0_23, %c0_24] : memref<4x256xf32, #tpu.memory_space<vmem>>, vector<4x256xf32>
      %cst_25 = arith.constant dense<0.000000e+00> : vector<4xf32>
      %31 = vector.multi_reduction <add>, %30, %cst_25 [1] : vector<4x256xf32> to vector<4xf32>
      %32 = vector.shape_cast %31 : vector<4xf32> to vector<4x1xf32>
      %c0_26 = arith.constant 0 : index
      %c0_27 = arith.constant 0 : index
      %33 = vector.load %arg7[%c0_26, %c0_27] : memref<4x256xf32, #tpu.memory_space<vmem>>, vector<4x256xf32>
      %cst_28 = arith.constant dense<0.000000e+00> : vector<4xf32>
      %34 = vector.multi_reduction <add>, %33, %cst_28 [1] : vector<4x256xf32> to vector<4xf32>
      %35 = vector.shape_cast %34 : vector<4xf32> to vector<4x1xf32>
      %36 = tpu.iota {dimensions = array<i32: 1>} : vector<4x3xi32>
      %c0_i32_29 = arith.constant 0 : i32
      %37 = vector.broadcast %c0_i32_29 : i32 to vector<4x3xi32>
      %38 = arith.cmpi eq, %36, %37 : vector<4x3xi32>
      %c1_i32 = arith.constant 1 : i32
      %39 = vector.broadcast %c1_i32 : i32 to vector<4x3xi32>
      %40 = arith.cmpi eq, %36, %39 : vector<4x3xi32>
      %41 = vector.shape_cast %32 : vector<4x1xf32> to vector<4x1xf32>
      %42 = vector.broadcast %41 : vector<4x1xf32> to vector<4x3xf32>
      %43 = vector.shape_cast %35 : vector<4x1xf32> to vector<4x1xf32>
      %44 = vector.broadcast %43 : vector<4x1xf32> to vector<4x3xf32>
      %45 = arith.select %40, %42, %44 : vector<4x3xi1>, vector<4x3xf32>
      %46 = vector.shape_cast %29 : vector<4x1xf32> to vector<4x1xf32>
      %47 = vector.broadcast %46 : vector<4x1xf32> to vector<4x3xf32>
      %48 = arith.select %38, %47, %45 : vector<4x3xi1>, vector<4x3xf32>
      %c0_30 = arith.constant 0 : index
      %c0_31 = arith.constant 0 : index
      %c0_32 = arith.constant 0 : index
      %49 = vector.load %arg4[%c0_30, %c0_31, %c0_32] : memref<1x4x3xf32, #tpu.memory_space<vmem>>, vector<1x4x3xf32>
      %50 = vector.shape_cast %49 : vector<1x4x3xf32> to vector<4x3xf32>
      %51 = vector.shape_cast %48 : vector<4x3xf32> to vector<1x4x3xf32>
      tpu.vector_store %arg4[%c0_30, %c0_31, %c0_32], %51 {strides = array<i32>} : memref<1x4x3xf32, #tpu.memory_space<vmem>>, vector<1x4x3xf32>,
    } else {
    }
    return
  }
  func.func @transform_0(%arg0: i32, %arg1: i32) -> (i32, i32, i32) {
    %c0_i32 = arith.constant 0 : i32
    %c0_i32_0 = arith.constant 0 : i32
    return %arg0, %c0_i32, %arg1 : i32, i32, i32
  }
  func.func @transform_1(%arg0: i32, %arg1: i32) -> (i32, i32, i32) {
    %c0_i32 = arith.constant 0 : i32
    %c0_i32_0 = arith.constant 0 : i32
    return %arg0, %c0_i32, %arg1 : i32, i32, i32
  }
  func.func @transform_2(%arg0: i32, %arg1: i32) -> (i32, i32, i32) {
    %c0_i32 = arith.constant 0 : i32
    %c0_i32_0 = arith.constant 0 : i32
    %c0_i32_1 = arith.constant 0 : i32
    return %arg0, %c0_i32, %c0_i32_0 : i32, i32, i32
  }
}

</mosaic_0001>

<llo_original>
// kernel: loss_wrapper_forward.1
$region0: #{loss_wrapper_forward.1}
  #allocation0 [shape = 'u32[]', space=smem, size = 0x4, offset = 0x4, fixed_abs, tag = 'smem constant byte address 0x4 - core index']
  #allocation1 [shape = 'u32[144,128]{1,0:T(1,128)}', space=vmem, size = 0x12000, scoped, tag = 'internal scratch']
  #allocation2 [shape = 'f32[4,256]{1,0:T(4,128)}', space=vmem, size = 0x1000, scoped, tag = 'scratch operand']
  #allocation3 [shape = 'f32[4,256]{1,0:T(4,128)}', space=vmem, size = 0x1000, scoped, tag = 'scratch operand']
  #allocation4 [shape = 'f32[4,256]{1,0:T(4,128)}', space=vmem, size = 0x1000, scoped, tag = 'scratch operand']
  %s0 = inlined_call_operand.vmem [shape: f32[2,4,256], index: 0, kind: input, shape index: {}]
  %s1 = inlined_call_operand.vmem [shape: f32[2,4,256], index: 1, kind: input, shape index: {}]
  %s2 = inlined_call_operand.vmem [shape: f32[2,4,3], index: 2, kind: output, shape index: {}]
  %s3 = sld [smem:[#allocation0]]
  $region49: #{loss_wrapper_forward.1} parent=0
    _
  %s5 = ssub.s32 1, %s3
  %s6 = scalar_select 0, %s5, %s3
  loop: start=0, step=1, limit=4
  $region2: #{loss_wrapper_forward.1} parent=0 // loop_pre_header
    _
  $region3: #{loss_wrapper_forward.1} parent=0 // loop_header
    %s8 = sphi 0, %s12
    %p9 = scmp.ge.s32.totalorder %s8, 4
    %s15 = sphi 0, %s27
    %s16 = sphi 0, %s23
    %s17 = sphi 0, %s15
    %s18 = sphi 0, %s16
    %s19 = sphi 0, %s17
    %s20 = sphi 0, %s18
    %s32 = sphi 0, %s34
    %s35 = sphi 0, %s32
    %s36 = sphi 0, %s35
    %s52 = sphi 0, %s36
    %s60 = sphi 0, %s62
    %s63 = sphi 0, %s60
    %s64 = sphi 0, %s63
    %s80 = sphi 0, %s64
    %s86 = sphi 0, %s88
    %s89 = sphi 0, %s86
    %s90 = sphi 0, %s89
    %s106 = sphi 0, %s90
  $region4: #{loss_wrapper_forward.1} parent=0 // loop_header_branch
    %11 = sbr.rel (%p9) target = $region8
  $region5: #{loss_wrapper_forward.1} parent=0 // loop_body
    %s13 = ssub.s32 %s8, 1
    %s14 = ssub.s32 %s8, 2
    %s21 = sadd.s32 1, %s16
    %p22 = scmp.ge.s32.totalorder %s21, 1
    %s23 = scalar_select %p22, 0, %s21
    %s24 = sadd.s32 1, %s15
    %s25 = scalar_select %p22, %s24, %s15
    %p26 = scmp.ge.s32.totalorder %s25, 2
    %s27 = scalar_select %p26, 0, %s25
    %s28 = ssub.s32 %s15, %s27
    %s29 = ssub.s32 %s16, %s23
    %s30 = sor.u32 %s28, %s29
    %p31 = scmp.eq.s32.totalorder %s30, 0
    %s33 = sadd.s32 %s32, 1
    %s34 = scalar_select %p31, %s32, %s33
    %p37 = pneg %p31
    %p38 = scmp.eq.s32.totalorder %s8, 1
    %p39 = por %p37, %p38
    %p40 = scmp.ne.s32.totalorder %s32, %s35
    %p41 = scmp.eq.s32.totalorder %s8, 0
    %p42 = por %p40, %p41
    %p43 = scmp.ne.s32.totalorder %s32, %s35
    %p44 = scmp.eq.s32.totalorder %s13, 1
    %p45 = por %p43, %p44
    %p46 = scmp.ne.s32.totalorder %s35, %s36
    %p47 = scmp.eq.s32.totalorder %s13, 0
    %p48 = por %p46, %p47
    %p49 = scmp.ne.s32.totalorder %s35, %s36
    %p50 = scmp.eq.s32.totalorder %s14, 1
    %p51 = por %p49, %p50
    %p53 = scmp.ne.s32.totalorder %s36, %s52
    %p54 = scmp.eq.s32.totalorder %s14, 0
    %p55 = por %p53, %p54
    %s56 = ssub.s32 %s15, %s27
    %s57 = ssub.s32 %s16, %s23
    %s58 = sor.u32 %s56, %s57
    %p59 = scmp.eq.s32.totalorder %s58, 0
    %s61 = sadd.s32 %s60, 1
    %s62 = scalar_select %p59, %s60, %s61
    %p65 = pneg %p59
    %p66 = scmp.eq.s32.totalorder %s8, 1
    %p67 = por %p65, %p66
    %p68 = scmp.ne.s32.totalorder %s60, %s63
    %p69 = scmp.eq.s32.totalorder %s8, 0
    %p70 = por %p68, %p69
    %p71 = scmp.ne.s32.totalorder %s60, %s63
    %p72 = scmp.eq.s32.totalorder %s13, 1
    %p73 = por %p71, %p72
    %p74 = scmp.ne.s32.totalorder %s63, %s64
    %p75 = scmp.eq.s32.totalorder %s13, 0
    %p76 = por %p74, %p75
    %p77 = scmp.ne.s32.totalorder %s63, %s64
    %p78 = scmp.eq.s32.totalorder %s14, 1
    %p79 = por %p77, %p78
    %p81 = scmp.ne.s32.totalorder %s64, %s80
    %p82 = scmp.eq.s32.totalorder %s14, 0
    %p83 = por %p81, %p82
    %s84 = ssub.s32 %s15, %s27
    %p85 = scmp.eq.s32.totalorder %s84, 0
    %s87 = sadd.s32 %s86, 1
    %s88 = scalar_select %p85, %s86, %s87
    %p91 = pneg %p85
    %p92 = scmp.eq.s32.totalorder %s8, 1
    %p93 = por %p91, %p92
    %p94 = scmp.ne.s32.totalorder %s86, %s89
    %p95 = scmp.eq.s32.totalorder %s8, 0
    %p96 = por %p94, %p95
    %p97 = scmp.ne.s32.totalorder %s86, %s89
    %p98 = scmp.eq.s32.totalorder %s13, 1
    %p99 = por %p97, %p98
    %p100 = scmp.ne.s32.totalorder %s89, %s90
    %p101 = scmp.eq.s32.totalorder %s13, 0
    %p102 = por %p100, %p101
    %p103 = scmp.ne.s32.totalorder %s89, %s90
    %p104 = scmp.eq.s32.totalorder %s14, 1
    %p105 = por %p103, %p104
    %p107 = scmp.ne.s32.totalorder %s90, %s106
    %p108 = scmp.eq.s32.totalorder %s14, 0
    %p109 = por %p107, %p108
    %p110 = scmp.le.s32.totalorder 1, %s8
    %p111 = scmp.lt.s32.totalorder %s8, 3
    %p112 = pnand %p110, %p111
    %p113 = pneg %p112
    // Predicated region
    $region9: #{loss_wrapper_forward.1} parent=5 // pred_check
      _
    $region10: #{loss_wrapper_forward.1} parent=5 // pred_check_branch
      %115 = sbr.rel (%p112) target = $region12
    $region11: #{loss_wrapper_forward.1} parent=5 // pred_region
      %s116 = ssub.s32 %s8, 1
    $region12: #{loss_wrapper_forward.1} parent=5 // pred_fallthru
      _
    %p117 = scmp.lt.s32.totalorder %s8, 2
    // Predicated region
    $region13: #{loss_wrapper_forward.1} parent=5 // pred_check
      %p118 = pneg %p117
    $region14: #{loss_wrapper_forward.1} parent=5 // pred_check_branch
      %120 = sbr.rel (%p118) target = $region16
    $region15: #{loss_wrapper_forward.1} parent=5 // pred_region
      // Predicated region
      $region17: #{loss_wrapper_forward.1} parent=15 // pred_check
        %p121 = pneg %p42
      $region18: #{loss_wrapper_forward.1} parent=15 // pred_check_branch
        %123 = sbr.rel (%p121) target = $region20
      $region19: #{loss_wrapper_forward.1} parent=15 // pred_region
        %s124 = smul.u32 2, %s16
        %p125 = scmp.lt.s32.totalorder %s15, 1
        %s126 = scalar_select %p125, %s15, 1
        %p127 = scmp.lt.s32.totalorder %s124, 1
        %s128 = scalar_select %p127, %s124, 1
        %s129 = smul.addr %s126, 2
        %s130 = sadd.s32 %s128, %s129
        %s131 = smul.addr %s130, 4
        %s132 = scalar_lea.vmem %s0, %s131
        %s133 = smul.u32 2, %s16
      $region20: #{loss_wrapper_forward.1} parent=15 // pred_fallthru
        _
      // Predicated region
      $region21: #{loss_wrapper_forward.1} parent=15 // pred_check
        %p134 = pneg %p70
      $region22: #{loss_wrapper_forward.1} parent=15 // pred_check_branch
        %136 = sbr.rel (%p134) target = $region24
      $region23: #{loss_wrapper_forward.1} parent=15 // pred_region
        %s137 = smul.u32 2, %s16
        %p138 = scmp.lt.s32.totalorder %s15, 1
        %s139 = scalar_select %p138, %s15, 1
        %p140 = scmp.lt.s32.totalorder %s137, 1
        %s141 = scalar_select %p140, %s137, 1
        %s142 = smul.addr %s139, 2
        %s143 = sadd.s32 %s141, %s142
        %s144 = smul.addr %s143, 4
        %s145 = scalar_lea.vmem %s1, %s144
        %s146 = smul.u32 2, %s16
      $region24: #{loss_wrapper_forward.1} parent=15 // pred_fallthru
        _
    $region16: #{loss_wrapper_forward.1} parent=5 // pred_fallthru
      _
    %p147 = scmp.le.s32.totalorder 1, %s8
    %p148 = scmp.lt.s32.totalorder %s8, 3
    %p149 = pnand %p147, %p148
    %p150 = pneg %p149
    // Predicated region
    $region25: #{loss_wrapper_forward.1} parent=5 // pred_check
      _
    $region26: #{loss_wrapper_forward.1} parent=5 // pred_check_branch
      %152 = sbr.rel (%p149) target = $region28
    $region27: #{loss_wrapper_forward.1} parent=5 // pred_region
      %s153 = ssub.s32 %s8, 1
      %s154 = smul.u32 2, %s18
      %p155 = scmp.lt.s32.totalorder %s17, 1
      %s156 = scalar_select %p155, %s17, 1
      %p157 = scmp.lt.s32.totalorder %s154, 1
      %s158 = scalar_select %p157, %s154, 1
      %s159 = smul.addr %s156, 2
      %s160 = sadd.s32 %s158, %s159
      %s161 = smul.addr %s160, 4
      %s162 = scalar_lea.vmem %s0, %s161
      %p163 = pneg %p48
      %p164 = pneg %p45
      %s165 = smul.u32 2, %s18
      %p166 = scmp.lt.s32.totalorder %s17, 1
      %s167 = scalar_select %p166, %s17, 1
      %p168 = scmp.lt.s32.totalorder %s165, 1
      %s169 = scalar_select %p168, %s165, 1
      %s170 = smul.addr %s167, 2
      %s171 = sadd.s32 %s169, %s170
      %s172 = smul.addr %s171, 4
      %s173 = scalar_lea.vmem %s1, %s172
      %p174 = pneg %p76
      %p175 = pneg %p73
      %p176 = pneg %p102
      %p177 = pneg %p99
      %p178 = scmp.lt.s32.totalorder %s17, 1
      %s179 = scalar_select %p178, %s17, 1
      %s180 = smul.addr %s179, 4
      %s181 = scalar_lea.vmem %s2, %s180
      %s182 = smul.u32 2, %s18
      %p183 = scmp.lt.s32.totalorder %s17, 1
      %s184 = scalar_select %p183, %s17, 1
      %p185 = scmp.lt.s32.totalorder %s182, 1
      %s186 = scalar_select %p185, %s182, 1
      %s187 = smul.addr %s184, 2
      %s188 = sadd.s32 %s186, %s187
      %s189 = smul.addr %s188, 4
      %s190 = scalar_lea.vmem %s0, %s189
      %s191 = smul.u32 2, %s18
      %s192 = smul.u32 2, %s18
      %p193 = scmp.lt.s32.totalorder %s17, 1
      %s194 = scalar_select %p193, %s17, 1
      %p195 = scmp.lt.s32.totalorder %s192, 1
      %s196 = scalar_select %p195, %s192, 1
      %s197 = smul.addr %s194, 2
      %s198 = sadd.s32 %s196, %s197
      %s199 = smul.addr %s198, 4
      %s200 = scalar_lea.vmem %s1, %s199
      %s201 = smul.u32 2, %s18
      %p202 = scmp.lt.s32.totalorder %s17, 1
      %s203 = scalar_select %p202, %s17, 1
      %s204 = smul.addr %s203, 4
      %s205 = scalar_lea.vmem %s2, %s204
      %p206 = scmp.eq.s32.totalorder %s18, 0
      // Predicated region
      $region29: #{loss_wrapper_forward.1} parent=27 // pred_check
        %p207 = pneg %p206
      $region30: #{loss_wrapper_forward.1} parent=27 // pred_check_branch
        %209 = sbr.rel (%p207) target = $region32
      $region31: #{loss_wrapper_forward.1} parent=27 // pred_region
        %210 = vst [vmem:[#allocation2] sm:$0xff] 0.0
        %211 = vst [vmem:[#allocation3] sm:$0xff] 0.0
        %212 = vst [vmem:[#allocation4] sm:$0xff] 0.0
      $region32: #{loss_wrapper_forward.1} parent=27 // pred_fallthru
        _
      %v213 = vld [vmem:[%s190] sm:$0xff]
      %v214 = vxor.u32 %v213, 2147483648
      %v215 = vmul.f32 %v214, 1.442695
      %v216 = vpow.pop %v215
      %v217 = vadd.f32 %v216, 1.0
      %v218 = vrcp.pop %v217
      %v219 = vmul.f32 1.0, %v218
      %v220 = vld [vmem:[%s200] sm:$0xff]
      %v221 = vld [vmem:[#allocation2] sm:$0xff]
      %v222 = vmul.f32 %v219, %v220
      %v223 = vadd.f32 %v221, %v222
      %224 = vst [vmem:[#allocation2] sm:$0xff] %v223
      %v225 = vld [vmem:[#allocation3] sm:$0xff]
      %v226 = vmul.f32 %v219, %v219
      %v227 = vadd.f32 %v225, %v226
      %228 = vst [vmem:[#allocation3] sm:$0xff] %v227
      %v229 = vld [vmem:[#allocation4] sm:$0xff]
      %v230 = vmul.f32 %v220, %v220
      %v231 = vadd.f32 %v229, %v230
      %232 = vst [vmem:[#allocation4] sm:$0xff] %v231
      // Predicated region
      $region33: #{loss_wrapper_forward.1} parent=27 // pred_check
        %p233 = pneg %p206
      $region34: #{loss_wrapper_forward.1} parent=27 // pred_check_branch
        %235 = sbr.rel (%p233) target = $region36
      $region35: #{loss_wrapper_forward.1} parent=27 // pred_region
        %v236 = vld [vmem:[#allocation2] sm:$0xff]
        %v238 = vcombine.high %v236, %v236
        %vm240 = vcmask 1043456
        %v241 = vsel %vm240, %v236, 0.0
        %v242 = vsel %vm240, %v238, 0.0
        %v243 = vadd.f32 %v241, %v242
        %244 = vadd.xlane.f32.xlu0 %v243
        %v245 = vpop.xlane.xlu0 %244
        %v246 = vld [vmem:[#allocation3] sm:$0xff]
        %v248 = vcombine.high %v246, %v246
        %v250 = vsel %vm240, %v246, 0.0
        %v251 = vsel %vm240, %v248, 0.0
        %v252 = vadd.f32 %v250, %v251
        %253 = vadd.xlane.f32.xlu0 %v252
        %v254 = vpop.xlane.xlu0 %253
        %v255 = vld [vmem:[#allocation4] sm:$0xff]
        %v257 = vcombine.high %v255, %v255
        %v259 = vsel %vm240, %v255, 0.0
        %v260 = vsel %vm240, %v257, 0.0
        %v261 = vadd.f32 %v259, %v260
        %262 = vadd.xlane.f32.xlu0 %v261
        %v263 = vpop.xlane.xlu0 %262
        %v264 = vlaneseq
        %v265 = vand.u32 %v264, 127
        %vm266 = vcmp.eq.s32.totalorder %v265, 0
        %vm267 = vcmp.eq.s32.totalorder %v265, 1
        %v268 = vsel %vm267, %v254, %v263
        %v269 = vsel %vm266, %v245, %v268
        %vm270 = vcmask 19456
        %271 = vst.msk [vmem:[%s205] sm:$0xf] %vm270, %v269
      $region36: #{loss_wrapper_forward.1} parent=27 // pred_fallthru
        _
      %p272 = scmp.lt.s32.totalorder %s17, 1
      %s273 = scalar_select %p272, %s17, 1
      %s274 = smul.addr %s273, 4
      %s275 = scalar_lea.vmem %s2, %s274
      // Predicated region
      $region37: #{loss_wrapper_forward.1} parent=27 // pred_check
        %p276 = pneg %p99
      $region38: #{loss_wrapper_forward.1} parent=27 // pred_check_branch
        %278 = sbr.rel (%p276) target = $region40
      $region39: #{loss_wrapper_forward.1} parent=27 // pred_region
        _
      $region40: #{loss_wrapper_forward.1} parent=27 // pred_fallthru
        _
    $region28: #{loss_wrapper_forward.1} parent=5 // pred_fallthru
      _
    %p279 = scmp.le.s32.totalorder 2, %s8
    // Predicated region
    $region41: #{loss_wrapper_forward.1} parent=5 // pred_check
      %p280 = pneg %p279
    $region42: #{loss_wrapper_forward.1} parent=5 // pred_check_branch
      %282 = sbr.rel (%p280) target = $region44
    $region43: #{loss_wrapper_forward.1} parent=5 // pred_region
      %s283 = ssub.s32 %s8, 2
      // Predicated region
      $region45: #{loss_wrapper_forward.1} parent=43 // pred_check
        %p284 = pneg %p105
      $region46: #{loss_wrapper_forward.1} parent=43 // pred_check_branch
        %286 = sbr.rel (%p284) target = $region48
      $region47: #{loss_wrapper_forward.1} parent=43 // pred_region
        %p287 = scmp.lt.s32.totalorder %s19, 1
        %s288 = scalar_select %p287, %s19, 1
        %s289 = smul.addr %s288, 4
        %s290 = scalar_lea.vmem %s2, %s289
      $region48: #{loss_wrapper_forward.1} parent=43 // pred_fallthru
        _
    $region44: #{loss_wrapper_forward.1} parent=5 // pred_fallthru
      _
  $region6: #{loss_wrapper_forward.1} parent=0 // loop_footer
    %s12 = sadd.s32 1, %s8
  $region7: #{loss_wrapper_forward.1} parent=0 // loop_footer_branch
    %7 = sbr.rel target = $region3
  $region8: #{loss_wrapper_forward.1} parent=0 // loop_exit
    _

</llo_original>
